<compile_context>
chip_gen: v6e
topology: v6e:2x2x1
jax: 0.10.0
libtpu: 0.0.40
codegen_flags: <defaults>
</compile_context>

<pallas_src>
import jax
import jax.numpy as jnp
import numpy as np
from jax.experimental import pallas as pl
from jax.experimental.pallas import tpu as pltpu


# --------------------------------------------------------------------------
# Fused kernel: one MXU contraction over the combined (node, feature) axis.
#   x_ref : (TM, N*F)     per-step tile of rows (M = B*T)
#   k_ref : (N*F, N*H)    resident folded factor  kron(adj^T, W^T)
#   b_ref : (1, N*H)      resident bias row (broadcast over sublanes)
#   o_ref : (TM, N*H)     lane-dense output slab, already in final (M, N*H) order
# --------------------------------------------------------------------------
def _agcn_fused_kernel(x_ref, k_ref, b_ref, o_ref):
    y = jnp.dot(x_ref[...], k_ref[...], preferred_element_type=jnp.float32)
    o_ref[...] = (y + b_ref[...]).astype(o_ref.dtype)


def _round_up(v, m):
    return ((v + m - 1) // m) * m


def _pick_tile_m(M, max_tile_m):
    # Small M: one grid step (splitting 16 rows into two 8-row steps is pure overhead).
    if M <= 1024:
        return _round_up(max(M, 1), 8)
    # Large M: keep >= 2 grid steps (v7x megacore), capped for VMEM headroom.
    return min(max_tile_m, _round_up(pl.cdiv(M, 2), 8))


# --------------------------------------------------------------------------
# Wrapper
# --------------------------------------------------------------------------
def adaptive_graph_conv(x, embedding_spatial, w_t, bias, *, max_tile_m=4096):
    """x: (B, T, N, F); embedding_spatial: (N, E); w_t: (F, H); bias: (H,)."""
    B, T, N, F = x.shape
    H = w_t.shape[1]
    M = B * T

    # ---- M-independent work done once, in plain JAX (tiny: N=7) ----
    e = embedding_spatial.astype(jnp.float32)
    s = jnp.maximum(e @ e.T, 0.0)                                   # relu(E E^T)
    adj = jnp.eye(N, dtype=jnp.float32) + jax.nn.softmax(s, axis=1)  # (N, N)

    w_t = w_t.astype(jnp.float32)
    # K[(k,f), (n,h)] = adj[n,k] * W^T[f,h]   == kron(adj^T, W^T), shape (N*F, N*H)
    k_factor = jnp.einsum('nk,fh->kfnh', adj, w_t).reshape(N * F, N * H)
    # bias row in (n*H + h) order: bias repeated per node
    b_row = jnp.tile(bias.astype(jnp.float32).reshape(1, H), (1, N))  # (1, N*H)

    # ---- stream x as (M, N*F); output comes back as (M, N*H) ----
    x_flat = x.reshape(M, N * F).astype(jnp.float32)

    tile_m = _pick_tile_m(M, max_tile_m)
    n_tiles = pl.cdiv(M, tile_m)

    out2d = pl.pallas_call(
        _agcn_fused_kernel,
        out_shape=jax.ShapeDtypeStruct((M, N * H), jnp.float32),
        grid=(n_tiles,),
        in_specs=[
            pl.BlockSpec((tile_m, N * F), lambda i: (i, 0)),   # x tile
            pl.BlockSpec((N * F, N * H), lambda i: (0, 0)),    # folded factor (resident)
            pl.BlockSpec((1, N * H), lambda i: (0, 0)),        # bias row (resident)
        ],
        out_specs=pl.BlockSpec((tile_m, N * H), lambda i: (i, 0)),
        compiler_params=pltpu.CompilerParams(
            dimension_semantics=("parallel",)),
    )(x_flat, k_factor, b_row)

    # free reshape: (M, N*H) -> (B, T, N, H)
    return out2d.reshape(B, T, N, H)


# --------------------------------------------------------------------------
# Pure-JAX reference (mirrors the PyTorch forward exactly)
# --------------------------------------------------------------------------
def reference(x, embedding_spatial, w_t, bias):
    N = embedding_spatial.shape[0]
    s = jnp.maximum(embedding_spatial @ embedding_spatial.T, 0.0)
    adj = jnp.eye(N, dtype=jnp.float32) + jax.nn.softmax(s, axis=1)
    B, T, n, F = x.shape
    feat = x.reshape(B * T, n, F)
    y = jnp.einsum('nk,mkf->mnf', adj, feat) @ w_t + bias
    return y.reshape(B, T, n, -1)


# --------------------------------------------------------------------------
if __name__ == "__main__":
    import math

    # module hyper-parameters
    hidden_size = 32
    feature_dim = 4
    node_num = 7
    embedding_size = 128

    # data shape implied by forward: (B, T, node_num, feature_dim)
    B, T = 2, 8

    key = jax.random.PRNGKey(0)
    k_emb, k_w, k_b, k_x = jax.random.split(key, 4)

    # deterministic parameter init (xavier_uniform for 2-D params, as in __init__)
    emb_bound = math.sqrt(6.0 / (node_num + embedding_size))
    embedding_spatial = jax.random.uniform(
        k_emb, (node_num, embedding_size), jnp.float32, -emb_bound, emb_bound)

    w_bound = math.sqrt(6.0 / (hidden_size + feature_dim))
    w = jax.random.uniform(
        k_w, (hidden_size, feature_dim), jnp.float32, -w_bound, w_bound)  # (H, F)
    w_t = w.T                                                             # (F, H)

    b_bound = 1.0 / math.sqrt(feature_dim)   # PyTorch Linear default bias init
    bias = jax.random.uniform(k_b, (hidden_size,), jnp.float32, -b_bound, b_bound)

    x = jax.random.normal(k_x, (B, T, node_num, feature_dim), jnp.float32)

    out = adaptive_graph_conv(x, embedding_spatial, w_t, bias)
    out = jax.block_until_ready(out)

    ref = reference(x, embedding_spatial, w_t, bias)
    assert out.shape == (B, T, node_num, hidden_size), out.shape
    np.testing.assert_allclose(np.asarray(out), np.asarray(ref), rtol=1e-5, atol=1e-5)

    print("KERNEL_OK")
</pallas_src>

<mosaic_0001>
module attributes {stable_mosaic.version = 11 : i64} {
  func.func @_agcn_fused_kernel(%arg0: i32, %arg1: memref<16x28xf32, #tpu.memory_space<vmem>>, %arg2: memref<28x224xf32, #tpu.memory_space<vmem>>, %arg3: memref<1x224xf32, #tpu.memory_space<vmem>>, %arg4: memref<16x224xf32, #tpu.memory_space<vmem>>) attributes {dimension_semantics = [#tpu.dimension_semantics<parallel>], iteration_bounds = array<i64: 1>, scalar_prefetch = 0 : i64, scratch_operands = 0 : i64, tpu.core_type = #tpu.core_type<tc>, window_params = [{transform_indices = @transform_0, window_bounds = array<i64: 16, 28>}, {pipeline_mode = #tpu.pipeline_mode<synchronous>, transform_indices = @transform_1, window_bounds = array<i64: 28, 224>}, {pipeline_mode = #tpu.pipeline_mode<synchronous>, transform_indices = @transform_2, window_bounds = array<i64: 1, 224>}, {transform_indices = @transform_3, window_bounds = array<i64: 16, 224>}]} {
    %c0 = arith.constant 0 : index
    %c0_0 = arith.constant 0 : index
    %0 = vector.load %arg1[%c0, %c0_0] : memref<16x28xf32, #tpu.memory_space<vmem>>, vector<16x28xf32>
    %c0_1 = arith.constant 0 : index
    %c0_2 = arith.constant 0 : index
    %1 = vector.load %arg2[%c0_1, %c0_2] : memref<28x224xf32, #tpu.memory_space<vmem>>, vector<28x224xf32>
    %cst = arith.constant dense<0.000000e+00> : vector<16x224xf32>
    %2 = tpu.matmul %0, %1, %cst {dimension_numbers = #tpu.dot_dimension_numbers<[1], [0], [0], [1], [0, 0, 1, 1], [], []>} : vector<16x28xf32>, vector<28x224xf32>, vector<16x224xf32> -> vector<16x224xf32>
    %c0_3 = arith.constant 0 : index
    %c0_4 = arith.constant 0 : index
    %3 = vector.load %arg3[%c0_3, %c0_4] : memref<1x224xf32, #tpu.memory_space<vmem>>, vector<1x224xf32>
    %4 = vector.broadcast %3 : vector<1x224xf32> to vector<16x224xf32>
    %5 = arith.addf %2, %4 : vector<16x224xf32>
    %c0_5 = arith.constant 0 : index
    %c0_6 = arith.constant 0 : index
    %6 = vector.load %arg4[%c0_5, %c0_6] : memref<16x224xf32, #tpu.memory_space<vmem>>, vector<16x224xf32>
    tpu.vector_store %arg4[%c0_5, %c0_6], %5 {strides = array<i32>} : memref<16x224xf32, #tpu.memory_space<vmem>>, vector<16x224xf32>,
    return
  }
  func.func @transform_0(%arg0: i32) -> (i32, i32) {
    %c0_i32 = arith.constant 0 : i32
    %c0_i32_0 = arith.constant 0 : i32
    return %arg0, %c0_i32 : i32, i32
  }
  func.func @transform_1(%arg0: i32) -> (i32, i32) {
    %c0_i32 = arith.constant 0 : i32
    %c0_i32_0 = arith.constant 0 : i32
    %c0_i32_1 = arith.constant 0 : i32
    return %c0_i32, %c0_i32_0 : i32, i32
  }
  func.func @transform_2(%arg0: i32) -> (i32, i32) {
    %c0_i32 = arith.constant 0 : i32
    %c0_i32_0 = arith.constant 0 : i32
    %c0_i32_1 = arith.constant 0 : i32
    return %c0_i32, %c0_i32_0 : i32, i32
  }
  func.func @transform_3(%arg0: i32) -> (i32, i32) {
    %c0_i32 = arith.constant 0 : i32
    %c0_i32_0 = arith.constant 0 : i32
    return %arg0, %c0_i32 : i32, i32
  }
}

</mosaic_0001>

<llo_original>
// kernel: tpu_custom_call.1
$region0: #{tpu_custom_call.1}
  #allocation0 [shape = 'u32[]', space=smem, size = 0x4, offset = 0x4, fixed_abs, tag = 'smem constant byte address 0x4 - core index']
  #allocation1 [shape = 'u32[144,128]{1,0:T(1,128)}', space=vmem, size = 0x12000, scoped, tag = 'internal scratch']
  %s0 = inlined_call_operand.hbm [shape: f32[16,28], index: 0, kind: input, shape index: {}]
  %s1 = inlined_call_operand.hbm [shape: f32[28,224], index: 1, kind: input, shape index: {}]
  %s2 = inlined_call_operand.vmem [shape: f32[1,224], index: 2, kind: input, shape index: {}]
  %s3 = inlined_call_operand.hbm [shape: f32[16,224], index: 3, kind: output, shape index: {}]
  %s4 = sld [smem:[#allocation0]]
  $region30: #{tpu_custom_call.1} parent=0
    _
  %s6 = ssub.s32 1, %s4
  %s7 = scalar_select 0, %s6, %s4
  $region1: #{tpu_custom_call.1} parent=0
    #allocation2 [shape = 'u8[8192]{0}', space=vmem, size = 0x2000, scoped, tag = 'input window, operand 0, single buffered']
    #allocation3 [shape = 's32[1]{0}', space=sflag, size = 0x4, scoped, tag = 'scoped memory for tpu_custom_call.1']
    #allocation4 [shape = 's32[1]{0}', space=sflag, size = 0x4, scoped, tag = 'scoped memory for tpu_custom_call.1']
    #allocation5 [shape = 'u8[32768]{0}', space=vmem, size = 0x8000, scoped, tag = 'input window, operand 1, single buffered']
    #allocation6 [shape = 's32[1]{0}', space=sflag, size = 0x4, scoped, tag = 'scoped memory for tpu_custom_call.1']
    #allocation7 [shape = 'u8[16384]{0}', space=vmem, size = 0x4000, scoped, tag = 'output window, operand 0, single buffered']
    %8 = vsyncpa [#allocation3], 0
    %9 = vsyncpa [#allocation6], 0
    %10 = vsyncpa [#allocation4], 0
    // Predicated region
    $region2: #{tpu_custom_call.1} parent=1 // pred_check
      _
    $region3: #{tpu_custom_call.1} parent=1 // pred_check_branch
      %12 = sbr.rel (0) target = $region5
    $region4: #{tpu_custom_call.1} parent=1 // pred_region
      %s14 = ssub.s32 256, 256
      %15 = vsyncadd [#allocation3], %s14
      %s16 = sshll.u32 [#allocation2], 4
      %s17 = int_to_ptr.vmem [resolvable:$true] %s16
      %22 = dma.hbm_to_vmem [thread:$0]  %s0, 256, %s17, [#allocation3], 128, 128, 8
    $region5: #{tpu_custom_call.1} parent=1 // pred_fallthru
      _
    // Predicated region
    $region6: #{tpu_custom_call.1} parent=1 // pred_check
      _
    $region7: #{tpu_custom_call.1} parent=1 // pred_check_branch
      %24 = sbr.rel (0) target = $region9
    $region8: #{tpu_custom_call.1} parent=1 // pred_region
      %s26 = ssub.s32 1024, 1024
      %27 = vsyncadd [#allocation6], %s26
      %s28 = sshll.u32 [#allocation5], 4
      %s29 = int_to_ptr.vmem [resolvable:$true] %s28
      %34 = dma.hbm_to_vmem [thread:$0]  %s1, 1024, %s29, [#allocation6], 256, 256, 16
    $region9: #{tpu_custom_call.1} parent=1 // pred_fallthru
      _
    // Predicated region
    $region10: #{tpu_custom_call.1} parent=1 // pred_check
      _
    $region11: #{tpu_custom_call.1} parent=1 // pred_check_branch
      %36 = sbr.rel (0) target = $region13
    $region12: #{tpu_custom_call.1} parent=1 // pred_region
      _
    $region13: #{tpu_custom_call.1} parent=1 // pred_fallthru
      _
    // Predicated region
    $region14: #{tpu_custom_call.1} parent=1 // pred_check
      _
    $region15: #{tpu_custom_call.1} parent=1 // pred_check_branch
      %38 = sbr.rel (0) target = $region17
    $region16: #{tpu_custom_call.1} parent=1 // pred_region
      %39 = dma.done [#allocation3], 256
    $region17: #{tpu_custom_call.1} parent=1 // pred_fallthru
      _
    // Predicated region
    $region18: #{tpu_custom_call.1} parent=1 // pred_check
      _
    $region19: #{tpu_custom_call.1} parent=1 // pred_check_branch
      %41 = sbr.rel (0) target = $region21
    $region20: #{tpu_custom_call.1} parent=1 // pred_region
      %42 = dma.done [#allocation6], 1024
    $region21: #{tpu_custom_call.1} parent=1 // pred_fallthru
      _
    %v43 = vld [vmem:[#allocation2] sm:$0xff]
    %v44 = vld [vmem:[#allocation2 + $0x8] sm:$0xff]
    %v45 = vld [vmem:[#allocation5] sm:$0xff]
    %v46 = vld [vmem:[#allocation5 + $0x8] sm:$0xff]
    %v47 = vld [vmem:[#allocation5 + $0x10] sm:$0xff]
    %v48 = vld [vmem:[#allocation5 + $0x18] sm:$0xff]
    %v49 = vld [vmem:[#allocation5 + $0x20] sm:$0xff]
    %v50 = vld [vmem:[#allocation5 + $0x28] sm:$0xff]
    %v51 = vld [vmem:[#allocation5 + $0x30] sm:$0xf]
    %v52 = vld [vmem:[#allocation5 + $0x38] sm:$0xf]
    %v53 = vld [vmem:[%s2] sm:$0x3]
    %v55 = vlaneseq
    %v56 = vshrl.u32 %v55, 7
    %v57 = vsub.s32 0, %v56
    %v58 = vrot.slane %v53, %v57
    %v59 = vlaneseq
    %v60 = vshrl.u32 %v59, 7
    %v61 = vsub.s32 1, %v60
    %v62 = vrot.slane %v53, %v61
    %vm65 = vcmask 228352
    %v67 = vsel %vm65, %v43, 0
    %v70 = vsel %vm65, %v44, 0
    %vm72 = vcmask 1043456
    %v74 = vsel %vm72, %v51, 0
    %v77 = vsel %vm72, %v52, 0
    %79 = vmatprep.subr.mxu0 0.0
    %80 = vmatpush1.msra.mxu0 0.0
    %81 = vmatprep.subr.mxu0 0.0
    %82 = vmatpush1.msra.mxu0 0.0
    %83 = vmatprep.subr.mxu0 0.0
    %84 = vmatpush1.msra.mxu0 0.0
    %85 = vmatprep.subr.mxu0 0.0
    %86 = vmatpush1.msra.mxu0 0.0
    %87 = vmatprep.subr.mxu0 0.0
    %88 = vmatpush1.msra.mxu0 0.0
    %89 = vmatprep.subr.mxu0 0.0
    %90 = vmatpush1.msra.mxu0 0.0
    %91 = vmatprep.subr.mxu0 0.0
    %92 = vmatpush1.msra.mxu0 0.0
    %93 = vmatprep.subr.mxu0 0.0
    %94 = vmatpush1.msra.mxu0 0.0
    %95 = vmatprep.subr.mxu0 0.0
    %96 = vmatpush1.msra.mxu0 0.0
    %97 = vmatprep.subr.mxu0 0.0
    %98 = vmatpush1.msra.mxu0 0.0
    %99 = vmatprep.subr.mxu0 0.0
    %100 = vmatpush1.msra.mxu0 0.0
    %101 = vmatprep.subr.mxu0 0.0
    %102 = vmatpush1.msra.mxu0 0.0
    %103 = vmatprep.subr.mxu0 %v77
    %104 = vmatpush1.msra.mxu0 %v74
    %105 = vmatprep.subr.mxu0 %v50
    %106 = vmatpush1.msra.mxu0 %v49
    %107 = vmatprep.subr.mxu0 %v48
    %108 = vmatpush1.msra.mxu0 %v47
    %109 = vmatprep.subr.mxu0 %v46
    %110 = vmatpush1.msra.mxu0 %v45
    %111 = vmatprep.subr.mxu0 0.0
    %112 = vmatpush2.msra.mxu0 0.0
    %113 = vmatprep.subr.mxu0 0.0
    %114 = vmatpush2.msra.mxu0 0.0
    %115 = vmatprep.subr.mxu0 0.0
    %116 = vmatpush2.msra.mxu0 0.0
    %117 = vmatprep.subr.mxu0 0.0
    %118 = vmatpush2.msra.mxu0 0.0
    %119 = vmatprep.subr.mxu0 0.0
    %120 = vmatpush2.msra.mxu0 0.0
    %121 = vmatprep.subr.mxu0 0.0
    %122 = vmatpush2.msra.mxu0 0.0
    %123 = vmatprep.subr.mxu0 0.0
    %124 = vmatpush2.msra.mxu0 0.0
    %125 = vmatprep.subr.mxu0 0.0
    %126 = vmatpush2.msra.mxu0 0.0
    %127 = vmatprep.subr.mxu0 0.0
    %128 = vmatpush2.msra.mxu0 0.0
    %129 = vmatprep.subr.mxu0 0.0
    %130 = vmatpush2.msra.mxu0 0.0
    %131 = vmatprep.subr.mxu0 0.0
    %132 = vmatpush2.msra.mxu0 0.0
    %133 = vmatprep.subr.mxu0 0.0
    %134 = vmatpush2.msra.mxu0 0.0
    %135 = vmatprep.subr.mxu0 0.0
    %136 = vmatpush2.msra.mxu0 0.0
    %137 = vmatprep.subr.mxu0 0.0
    %138 = vmatpush2.msra.mxu0 0.0
    %139 = vmatprep.subr.mxu0 0.0
    %140 = vmatpush2.msra.mxu0 0.0
    %141 = vmatprep.subr.mxu0 0.0
    %142 = vmatpush2.msra.mxu0 0.0
    %143 = vmatprep.mubr.f32.mxu0 0.0
    %144 = vmatmul.mubr.f32.gmra.mxu0 %v67
    %v145 = vpop.f32.mrf.mxu0
    %v146 = vadd.f32 %v58, %v145
    %v147 = vpop.f32.mrf.mxu0
    %v148 = vadd.f32 %v62, %v147
    %149 = vmatprep.mubr.f32.mxu0 0.0
    %150 = vmatmul.mubr.f32.gmra.mxu0 %v70
    %v151 = vpop.f32.mrf.mxu0
    %v152 = vadd.f32 %v58, %v151
    %v153 = vpop.f32.mrf.mxu0
    %v154 = vadd.f32 %v62, %v153
    %155 = vdwg.mxu0
    %156 = vst [vmem:[#allocation7] sm:$0xff] %v146
    %vm157 = vcmask 785408
    %158 = vst.msk [vmem:[#allocation7 + $0x8] sm:$0xff] %vm157, %v148
    %159 = vst [vmem:[#allocation7 + $0x10] sm:$0xff] %v152
    %160 = vst.msk [vmem:[#allocation7 + $0x18] sm:$0xff] %vm157, %v154
    // Predicated region
    $region22: #{tpu_custom_call.1} parent=1 // pred_check
      _
    $region23: #{tpu_custom_call.1} parent=1 // pred_check_branch
      %162 = sbr.rel (0) target = $region25
    $region24: #{tpu_custom_call.1} parent=1 // pred_region
      %s164 = ssub.s32 512, 512
      %165 = vsyncadd [#allocation4], %s164
      %s166 = sshll.u32 [#allocation7], 4
      %s167 = int_to_ptr.vmem [resolvable:$true] %s166
      %172 = dma.vmem_to_hbm [thread:$0]  %s167, 512, %s3, [#allocation4], 256, 256, 16
    $region25: #{tpu_custom_call.1} parent=1 // pred_fallthru
      _
    // Predicated region
    $region26: #{tpu_custom_call.1} parent=1 // pred_check
      _
    $region27: #{tpu_custom_call.1} parent=1 // pred_check_branch
      %174 = sbr.rel (0) target = $region29
    $region28: #{tpu_custom_call.1} parent=1 // pred_region
      %175 = dma.done [#allocation4], 512
    $region29: #{tpu_custom_call.1} parent=1 // pred_fallthru
      _
    %176 = vsyncpa [#allocation3], 1
    %177 = vsyncpa [#allocation6], 1
    %178 = vsyncpa [#allocation4], 1

</llo_original>
